<compile_context>
chip_gen: v7x
topology: tpu7x:2x2x1
jax: 0.10.0
libtpu: 0.0.40
codegen_flags: <defaults>
</compile_context>

<pallas_src>
import functools

import jax
import jax.numpy as jnp
from jax import lax
from jax.experimental import pallas as pl
from jax.experimental.pallas import tpu as pltpu

LN_EPS = 1e-5  # PyTorch nn.LayerNorm default


def _round_up(x, m):
    return (x + m - 1) // m * m


def _linear_relu(x, w_ref, b_ref, use_bf16):
    # x: (tm, in_p) f32;  w_ref: (out_p, in_p) PyTorch-style;  b_ref: (1, out_p)
    w = w_ref[...]
    if use_bf16:
        x = x.astype(jnp.bfloat16)
        w = w.astype(jnp.bfloat16)
    y = lax.dot_general(
        x, w,
        dimension_numbers=(((1,), (1,)), ((), ())),   # x @ w.T on the MXU
        preferred_element_type=jnp.float32,
    )
    return jnp.maximum(y + b_ref[...], 0.0)


def encoder_profile_kernel(x_ref, w1_ref, b1_ref, w2_ref, b2_ref,
                           w3_ref, b3_ref, g_ref, beta_ref, o_ref,
                           *, out_dim, use_bf16):
    x = x_ref[...].astype(jnp.float32)

    h = _linear_relu(x, w1_ref, b1_ref, use_bf16)
    h = _linear_relu(h, w2_ref, b2_ref, use_bf16)
    h = _linear_relu(h, w3_ref, b3_ref, use_bf16)   # (tm, out_p), padded lanes == 0

    out_p = h.shape[-1]
    if out_dim == out_p:
        # Feature dim already lane-dense: plain LayerNorm.
        mean = jnp.mean(h, axis=-1, keepdims=True)
        centered = h - mean
        var = jnp.mean(centered * centered, axis=-1, keepdims=True)
    else:
        # Padded lanes of h are exactly 0 (zero-padded weights/biases), so the
        # sum over all lanes equals the sum over real lanes; mask the variance.
        inv_n = 1.0 / out_dim
        mean = jnp.sum(h, axis=-1, keepdims=True) * inv_n
        lane = lax.broadcasted_iota(jnp.int32, h.shape, 1)
        mask = lane < out_dim
        centered = jnp.where(mask, h - mean, 0.0)
        var = jnp.sum(centered * centered, axis=-1, keepdims=True) * inv_n

    y = centered * lax.rsqrt(var + LN_EPS)
    o_ref[...] = (y * g_ref[...] + beta_ref[...]).astype(o_ref.dtype)


def encoder_profile(profile, w1, b1, w2, b2, w3, b3, gamma, beta,
                    *, tm=256, use_bf16=False):
    """profile: (B, in_dim).  w*: PyTorch-style (out_features, in_features).
    Returns (B, out_dim)."""
    assert profile.ndim == 2
    M, in_dim = profile.shape
    hid_dim = w1.shape[0]
    hid_dim2 = w2.shape[0]
    out_dim = w3.shape[0]

    # Lane-dense feature dims (multiples of 128).
    in_p = _round_up(in_dim, 128)
    h1_p = _round_up(hid_dim, 128)
    h2_p = _round_up(hid_dim2, 128)
    out_p = _round_up(out_dim, 128)

    # Row tile: big tiles amortize the ~0.35us per-grid-step overhead and fill
    # MXU rows; clamp for small batches, keep a multiple of 8 sublanes.
    tm_eff = _round_up(min(tm, _round_up(M, 8)), 8)
    Mp = _round_up(M, tm_eff)

    f32 = jnp.float32
    x = jnp.pad(profile.astype(f32), ((0, Mp - M), (0, in_p - in_dim)))
    w1p = jnp.pad(w1.astype(f32), ((0, h1_p - hid_dim), (0, in_p - in_dim)))
    b1p = jnp.pad(b1.astype(f32), (0, h1_p - hid_dim)).reshape(1, h1_p)
    w2p = jnp.pad(w2.astype(f32), ((0, h2_p - hid_dim2), (0, h1_p - hid_dim)))
    b2p = jnp.pad(b2.astype(f32), (0, h2_p - hid_dim2)).reshape(1, h2_p)
    w3p = jnp.pad(w3.astype(f32), ((0, out_p - out_dim), (0, h2_p - hid_dim2)))
    b3p = jnp.pad(b3.astype(f32), (0, out_p - out_dim)).reshape(1, out_p)
    gp = jnp.pad(gamma.astype(f32), (0, out_p - out_dim)).reshape(1, out_p)
    bp = jnp.pad(beta.astype(f32), (0, out_p - out_dim)).reshape(1, out_p)

    kernel = functools.partial(encoder_profile_kernel,
                               out_dim=out_dim, use_bf16=use_bf16)

    out = pl.pallas_call(
        kernel,
        out_shape=jax.ShapeDtypeStruct((Mp, out_p), profile.dtype),
        grid_spec=pltpu.PrefetchScalarGridSpec(
            num_scalar_prefetch=0,
            grid=(Mp // tm_eff,),
            in_specs=[
                pl.BlockSpec((tm_eff, in_p), lambda i: (i, 0)),   # x row tile
                pl.BlockSpec((h1_p, in_p), lambda i: (0, 0)),     # W1 (resident)
                pl.BlockSpec((1, h1_p), lambda i: (0, 0)),        # b1
                pl.BlockSpec((h2_p, h1_p), lambda i: (0, 0)),     # W2 (resident)
                pl.BlockSpec((1, h2_p), lambda i: (0, 0)),        # b2
                pl.BlockSpec((out_p, h2_p), lambda i: (0, 0)),    # W3 (resident)
                pl.BlockSpec((1, out_p), lambda i: (0, 0)),       # b3
                pl.BlockSpec((1, out_p), lambda i: (0, 0)),       # gamma
                pl.BlockSpec((1, out_p), lambda i: (0, 0)),       # beta
            ],
            out_specs=pl.BlockSpec((tm_eff, out_p), lambda i: (i, 0)),
        ),
        compiler_params=pltpu.CompilerParams(
            dimension_semantics=("parallel",),   # row axis shards across TCs (v7x)
            vmem_limit_bytes=48 * 1024 * 1024,   # above scoped default, < v7x 64MiB
        ),
    )(x, w1p, b1p, w2p, b2p, w3p, b3p, gp, bp)

    return out[:M, :out_dim]


def encoder_profile_ref(profile, w1, b1, w2, b2, w3, b3, gamma, beta):
    h = jnp.maximum(profile @ w1.T + b1, 0.0)
    h = jnp.maximum(h @ w2.T + b2, 0.0)
    h = jnp.maximum(h @ w3.T + b3, 0.0)
    mean = jnp.mean(h, axis=-1, keepdims=True)
    var = jnp.mean((h - mean) ** 2, axis=-1, keepdims=True)
    return (h - mean) / jnp.sqrt(var + LN_EPS) * gamma + beta


if __name__ == "__main__":
    # Small shapes consistent with the module's forward: profile is (bs, in_dim).
    B, IN_DIM, HID_DIM, HID_DIM2, OUT_DIM = 16, 32, 32, 32, 32

    key = jax.random.PRNGKey(0)
    kx, k1, k2, k3, k4, k5, k6 = jax.random.split(key, 7)

    profile = jax.random.normal(kx, (B, IN_DIM), dtype=jnp.float32)

    # PyTorch nn.Linear-style uniform init bounds (deterministic).
    def _init(kw, kb, fan_out, fan_in):
        bound = 1.0 / (fan_in ** 0.5)
        w = jax.random.uniform(kw, (fan_out, fan_in), jnp.float32, -bound, bound)
        b = jax.random.uniform(kb, (fan_out,), jnp.float32, -bound, bound)
        return w, b

    w1, b1 = _init(k1, k2, HID_DIM, IN_DIM)
    w2, b2 = _init(k3, k4, HID_DIM2, HID_DIM)
    w3, b3 = _init(k5, k6, OUT_DIM, HID_DIM2)
    gamma = jnp.ones((OUT_DIM,), jnp.float32)   # nn.LayerNorm defaults
    beta = jnp.zeros((OUT_DIM,), jnp.float32)

    out = encoder_profile(profile, w1, b1, w2, b2, w3, b3, gamma, beta)
    out = jax.block_until_ready(out)

    ref = encoder_profile_ref(profile, w1, b1, w2, b2, w3, b3, gamma, beta)
    assert out.shape == (B, OUT_DIM)
    assert jnp.allclose(out, ref, atol=1e-4, rtol=1e-4), "mismatch vs reference"

    print("KERNEL_OK")
</pallas_src>

<mosaic_0001>
module attributes {stable_mosaic.version = 11 : i64} {
  func.func @encoder_profile_kernel(%arg0: i32, %arg1: memref<16x128xf32, #tpu.memory_space<vmem>>, %arg2: memref<128x128xf32, #tpu.memory_space<vmem>>, %arg3: memref<1x128xf32, #tpu.memory_space<vmem>>, %arg4: memref<128x128xf32, #tpu.memory_space<vmem>>, %arg5: memref<1x128xf32, #tpu.memory_space<vmem>>, %arg6: memref<128x128xf32, #tpu.memory_space<vmem>>, %arg7: memref<1x128xf32, #tpu.memory_space<vmem>>, %arg8: memref<1x128xf32, #tpu.memory_space<vmem>>, %arg9: memref<1x128xf32, #tpu.memory_space<vmem>>, %arg10: memref<16x128xf32, #tpu.memory_space<vmem>>) attributes {dimension_semantics = [#tpu.dimension_semantics<parallel>], iteration_bounds = array<i64: 1>, scalar_prefetch = 0 : i64, scratch_operands = 0 : i64, tpu.core_type = #tpu.core_type<tc>, window_params = [{transform_indices = @transform_0, window_bounds = array<i64: 16, 128>}, {pipeline_mode = #tpu.pipeline_mode<synchronous>, transform_indices = @transform_1, window_bounds = array<i64: 128, 128>}, {pipeline_mode = #tpu.pipeline_mode<synchronous>, transform_indices = @transform_2, window_bounds = array<i64: 1, 128>}, {pipeline_mode = #tpu.pipeline_mode<synchronous>, transform_indices = @transform_3, window_bounds = array<i64: 128, 128>}, {pipeline_mode = #tpu.pipeline_mode<synchronous>, transform_indices = @transform_4, window_bounds = array<i64: 1, 128>}, {pipeline_mode = #tpu.pipeline_mode<synchronous>, transform_indices = @transform_5, window_bounds = array<i64: 128, 128>}, {pipeline_mode = #tpu.pipeline_mode<synchronous>, transform_indices = @transform_6, window_bounds = array<i64: 1, 128>}, {pipeline_mode = #tpu.pipeline_mode<synchronous>, transform_indices = @transform_7, window_bounds = array<i64: 1, 128>}, {pipeline_mode = #tpu.pipeline_mode<synchronous>, transform_indices = @transform_8, window_bounds = array<i64: 1, 128>}, {transform_indices = @transform_9, window_bounds = array<i64: 16, 128>}]} {
    %c0 = arith.constant 0 : index
    %c0_0 = arith.constant 0 : index
    %0 = vector.load %arg1[%c0, %c0_0] : memref<16x128xf32, #tpu.memory_space<vmem>>, vector<16x128xf32>
    %c0_1 = arith.constant 0 : index
    %c0_2 = arith.constant 0 : index
    %1 = vector.load %arg2[%c0_1, %c0_2] : memref<128x128xf32, #tpu.memory_space<vmem>>, vector<128x128xf32>
    %cst = arith.constant dense<0.000000e+00> : vector<16x128xf32>
    %2 = tpu.matmul %0, %1, %cst {dimension_numbers = #tpu.dot_dimension_numbers<[1], [1], [0], [0], [0, 0, 1, 0], [], []>} : vector<16x128xf32>, vector<128x128xf32>, vector<16x128xf32> -> vector<16x128xf32>
    %c0_3 = arith.constant 0 : index
    %c0_4 = arith.constant 0 : index
    %3 = vector.load %arg3[%c0_3, %c0_4] : memref<1x128xf32, #tpu.memory_space<vmem>>, vector<1x128xf32>
    %4 = vector.broadcast %3 : vector<1x128xf32> to vector<16x128xf32>
    %5 = arith.addf %2, %4 : vector<16x128xf32>
    %cst_5 = arith.constant 0.000000e+00 : f32
    %6 = vector.broadcast %cst_5 : f32 to vector<16x128xf32>
    %7 = arith.maximumf %5, %6 : vector<16x128xf32>
    %c0_6 = arith.constant 0 : index
    %c0_7 = arith.constant 0 : index
    %8 = vector.load %arg4[%c0_6, %c0_7] : memref<128x128xf32, #tpu.memory_space<vmem>>, vector<128x128xf32>
    %cst_8 = arith.constant dense<0.000000e+00> : vector<16x128xf32>
    %9 = tpu.matmul %7, %8, %cst_8 {dimension_numbers = #tpu.dot_dimension_numbers<[1], [1], [0], [0], [0, 0, 1, 0], [], []>} : vector<16x128xf32>, vector<128x128xf32>, vector<16x128xf32> -> vector<16x128xf32>
    %c0_9 = arith.constant 0 : index
    %c0_10 = arith.constant 0 : index
    %10 = vector.load %arg5[%c0_9, %c0_10] : memref<1x128xf32, #tpu.memory_space<vmem>>, vector<1x128xf32>
    %11 = vector.broadcast %10 : vector<1x128xf32> to vector<16x128xf32>
    %12 = arith.addf %9, %11 : vector<16x128xf32>
    %cst_11 = arith.constant 0.000000e+00 : f32
    %13 = vector.broadcast %cst_11 : f32 to vector<16x128xf32>
    %14 = arith.maximumf %12, %13 : vector<16x128xf32>
    %c0_12 = arith.constant 0 : index
    %c0_13 = arith.constant 0 : index
    %15 = vector.load %arg6[%c0_12, %c0_13] : memref<128x128xf32, #tpu.memory_space<vmem>>, vector<128x128xf32>
    %cst_14 = arith.constant dense<0.000000e+00> : vector<16x128xf32>
    %16 = tpu.matmul %14, %15, %cst_14 {dimension_numbers = #tpu.dot_dimension_numbers<[1], [1], [0], [0], [0, 0, 1, 0], [], []>} : vector<16x128xf32>, vector<128x128xf32>, vector<16x128xf32> -> vector<16x128xf32>
    %c0_15 = arith.constant 0 : index
    %c0_16 = arith.constant 0 : index
    %17 = vector.load %arg7[%c0_15, %c0_16] : memref<1x128xf32, #tpu.memory_space<vmem>>, vector<1x128xf32>
    %18 = vector.broadcast %17 : vector<1x128xf32> to vector<16x128xf32>
    %19 = arith.addf %16, %18 : vector<16x128xf32>
    %cst_17 = arith.constant 0.000000e+00 : f32
    %20 = vector.broadcast %cst_17 : f32 to vector<16x128xf32>
    %21 = arith.maximumf %19, %20 : vector<16x128xf32>
    %cst_18 = arith.constant dense<0.000000e+00> : vector<16xf32>
    %22 = vector.multi_reduction <add>, %21, %cst_18 [1] : vector<16x128xf32> to vector<16xf32>
    %23 = vector.shape_cast %22 : vector<16xf32> to vector<16x1xf32>
    %cst_19 = arith.constant 3.125000e-02 : f32
    %24 = vector.broadcast %cst_19 : f32 to vector<16x1xf32>
    %25 = arith.mulf %23, %24 : vector<16x1xf32>
    %26 = tpu.iota {dimensions = array<i32: 1>} : vector<16x128xi32>
    %c32_i32 = arith.constant 32 : i32
    %27 = vector.broadcast %c32_i32 : i32 to vector<16x128xi32>
    %28 = arith.cmpi slt, %26, %27 : vector<16x128xi32>
    %29 = vector.broadcast %25 : vector<16x1xf32> to vector<16x128xf32>
    %30 = arith.subf %21, %29 : vector<16x128xf32>
    %cst_20 = arith.constant 0.000000e+00 : f32
    %31 = vector.broadcast %cst_20 : f32 to vector<16x128xf32>
    %32 = arith.select %28, %30, %31 : vector<16x128xi1>, vector<16x128xf32>
    %33 = arith.mulf %32, %32 : vector<16x128xf32>
    %cst_21 = arith.constant dense<0.000000e+00> : vector<16xf32>
    %34 = vector.multi_reduction <add>, %33, %cst_21 [1] : vector<16x128xf32> to vector<16xf32>
    %35 = vector.shape_cast %34 : vector<16xf32> to vector<16x1xf32>
    %cst_22 = arith.constant 3.125000e-02 : f32
    %36 = vector.broadcast %cst_22 : f32 to vector<16x1xf32>
    %37 = arith.mulf %35, %36 : vector<16x1xf32>
    %cst_23 = arith.constant 9.99999974E-6 : f32
    %38 = vector.broadcast %cst_23 : f32 to vector<16x1xf32>
    %39 = arith.addf %37, %38 : vector<16x1xf32>
    %40 = math.rsqrt %39 : vector<16x1xf32>
    %41 = vector.broadcast %40 : vector<16x1xf32> to vector<16x128xf32>
    %42 = arith.mulf %32, %41 : vector<16x128xf32>
    %c0_24 = arith.constant 0 : index
    %c0_25 = arith.constant 0 : index
    %43 = vector.load %arg8[%c0_24, %c0_25] : memref<1x128xf32, #tpu.memory_space<vmem>>, vector<1x128xf32>
    %44 = vector.broadcast %43 : vector<1x128xf32> to vector<16x128xf32>
    %45 = arith.mulf %42, %44 : vector<16x128xf32>
    %c0_26 = arith.constant 0 : index
    %c0_27 = arith.constant 0 : index
    %46 = vector.load %arg9[%c0_26, %c0_27] : memref<1x128xf32, #tpu.memory_space<vmem>>, vector<1x128xf32>
    %47 = vector.broadcast %46 : vector<1x128xf32> to vector<16x128xf32>
    %48 = arith.addf %45, %47 : vector<16x128xf32>
    %c0_28 = arith.constant 0 : index
    %c0_29 = arith.constant 0 : index
    %49 = vector.load %arg10[%c0_28, %c0_29] : memref<16x128xf32, #tpu.memory_space<vmem>>, vector<16x128xf32>
    tpu.vector_store %arg10[%c0_28, %c0_29], %48 {strides = array<i32>} : memref<16x128xf32, #tpu.memory_space<vmem>>, vector<16x128xf32>,
    return
  }
  func.func @transform_0(%arg0: i32) -> (i32, i32) {
    %c0_i32 = arith.constant 0 : i32
    %c0_i32_0 = arith.constant 0 : i32
    return %arg0, %c0_i32 : i32, i32
  }
  func.func @transform_1(%arg0: i32) -> (i32, i32) {
    %c0_i32 = arith.constant 0 : i32
    %c0_i32_0 = arith.constant 0 : i32
    %c0_i32_1 = arith.constant 0 : i32
    return %c0_i32, %c0_i32_0 : i32, i32
  }
  func.func @transform_2(%arg0: i32) -> (i32, i32) {
    %c0_i32 = arith.constant 0 : i32
    %c0_i32_0 = arith.constant 0 : i32
    %c0_i32_1 = arith.constant 0 : i32
    return %c0_i32, %c0_i32_0 : i32, i32
  }
  func.func @transform_3(%arg0: i32) -> (i32, i32) {
    %c0_i32 = arith.constant 0 : i32
    %c0_i32_0 = arith.constant 0 : i32
    %c0_i32_1 = arith.constant 0 : i32
    return %c0_i32, %c0_i32_0 : i32, i32
  }
  func.func @transform_4(%arg0: i32) -> (i32, i32) {
    %c0_i32 = arith.constant 0 : i32
    %c0_i32_0 = arith.constant 0 : i32
    %c0_i32_1 = arith.constant 0 : i32
    return %c0_i32, %c0_i32_0 : i32, i32
  }
  func.func @transform_5(%arg0: i32) -> (i32, i32) {
    %c0_i32 = arith.constant 0 : i32
    %c0_i32_0 = arith.constant 0 : i32
    %c0_i32_1 = arith.constant 0 : i32
    return %c0_i32, %c0_i32_0 : i32, i32
  }
  func.func @transform_6(%arg0: i32) -> (i32, i32) {
    %c0_i32 = arith.constant 0 : i32
    %c0_i32_0 = arith.constant 0 : i32
    %c0_i32_1 = arith.constant 0 : i32
    return %c0_i32, %c0_i32_0 : i32, i32
  }
  func.func @transform_7(%arg0: i32) -> (i32, i32) {
    %c0_i32 = arith.constant 0 : i32
    %c0_i32_0 = arith.constant 0 : i32
    %c0_i32_1 = arith.constant 0 : i32
    return %c0_i32, %c0_i32_0 : i32, i32
  }
  func.func @transform_8(%arg0: i32) -> (i32, i32) {
    %c0_i32 = arith.constant 0 : i32
    %c0_i32_0 = arith.constant 0 : i32
    %c0_i32_1 = arith.constant 0 : i32
    return %c0_i32, %c0_i32_0 : i32, i32
  }
  func.func @transform_9(%arg0: i32) -> (i32, i32) {
    %c0_i32 = arith.constant 0 : i32
    %c0_i32_0 = arith.constant 0 : i32
    return %arg0, %c0_i32 : i32, i32
  }
}

</mosaic_0001>

<llo_original>
// kernel: tpu_custom_call.1
$region0: #{tpu_custom_call.1}
  #allocation0 [shape = 'u32[]', space=smem, size = 0x4, offset = 0x4, fixed_abs, tag = 'smem constant byte address 0x4 - core index']
  #allocation1 [shape = 'u32[144,128]{1,0:T(1,128)}', space=vmem, size = 0x12000, scoped, tag = 'internal scratch']
  %s0 = inlined_call_operand.hbm [shape: f32[16,128], index: 0, kind: input, shape index: {}]
  %s1 = inlined_call_operand.hbm [shape: f32[128,128], index: 1, kind: input, shape index: {}]
  %s2 = inlined_call_operand.vmem [shape: f32[1,128], index: 2, kind: input, shape index: {}]
  %s3 = inlined_call_operand.hbm [shape: f32[128,128], index: 3, kind: input, shape index: {}]
  %s4 = inlined_call_operand.vmem [shape: f32[1,128], index: 4, kind: input, shape index: {}]
  %s5 = inlined_call_operand.hbm [shape: f32[128,128], index: 5, kind: input, shape index: {}]
  %s6 = inlined_call_operand.vmem [shape: f32[1,128], index: 6, kind: input, shape index: {}]
  %s7 = inlined_call_operand.vmem [shape: f32[1,128], index: 7, kind: input, shape index: {}]
  %s8 = inlined_call_operand.vmem [shape: f32[1,128], index: 8, kind: input, shape index: {}]
  %s9 = inlined_call_operand.hbm [shape: f32[16,128], index: 9, kind: output, shape index: {}]
  %s10 = sld [smem:[#allocation0]]
  $region62: #{tpu_custom_call.1} parent=0
    _
  %s12 = ssub.s32 1, %s10
  %s13 = scalar_select 0, %s12, %s10
  $region1: #{tpu_custom_call.1} parent=0
    #allocation2 [shape = 'u8[8192]{0}', space=vmem, size = 0x2000, scoped, tag = 'input window, operand 0, single buffered']
    #allocation3 [shape = 's32[1]{0}', space=sflag, size = 0x4, scoped, tag = 'scoped memory for tpu_custom_call.1']
    #allocation4 [shape = 's32[1]{0}', space=sflag, size = 0x4, scoped, tag = 'scoped memory for tpu_custom_call.1']
    #allocation5 [shape = 'u8[65536]{0}', space=vmem, size = 0x10000, scoped, tag = 'input window, operand 1, single buffered']
    #allocation6 [shape = 's32[1]{0}', space=sflag, size = 0x4, scoped, tag = 'scoped memory for tpu_custom_call.1']
    #allocation7 [shape = 'u8[65536]{0}', space=vmem, size = 0x10000, scoped, tag = 'input window, operand 3, single buffered']
    #allocation8 [shape = 'u8[65536]{0}', space=vmem, size = 0x10000, scoped, tag = 'input window, operand 5, single buffered']
    #allocation9 [shape = 's32[1]{0}', space=sflag, size = 0x4, scoped, tag = 'scoped memory for tpu_custom_call.1']
    #allocation10 [shape = 'u8[8192]{0}', space=vmem, size = 0x2000, scoped, tag = 'output window, operand 0, single buffered']
    %14 = vsyncpa [#allocation3], 0
    %15 = vsyncpa [#allocation6], 0
    %16 = vsyncpa [#allocation9], 0
    %17 = vsyncpa [#allocation4], 0
    // Predicated region
    $region2: #{tpu_custom_call.1} parent=1 // pred_check
      _
    $region3: #{tpu_custom_call.1} parent=1 // pred_check_branch
      %19 = sbr.rel (0) target = $region5
    $region4: #{tpu_custom_call.1} parent=1 // pred_region
      %s21 = ssub.s32 256, 256
      %22 = vsyncadd [#allocation3], %s21
      %s23 = sshll.u32 [#allocation2], 4
      %s24 = int_to_ptr.vmem [resolvable:$true] %s23
      %29 = dma.hbm_to_vmem [thread:$0]  %s0, 256, %s24, [#allocation3], 128, 128, 8
    $region5: #{tpu_custom_call.1} parent=1 // pred_fallthru
      _
    // Predicated region
    $region6: #{tpu_custom_call.1} parent=1 // pred_check
      _
    $region7: #{tpu_custom_call.1} parent=1 // pred_check_branch
      %31 = sbr.rel (0) target = $region9
    $region8: #{tpu_custom_call.1} parent=1 // pred_region
      %s33 = ssub.s32 2048, 2048
      %34 = vsyncadd [#allocation6], %s33
      %s35 = sshll.u32 [#allocation5], 4
      %s36 = int_to_ptr.vmem [resolvable:$true] %s35
      %41 = dma.hbm_to_vmem [thread:$0]  %s1, 2048, %s36, [#allocation6], 128, 128, 8
    $region9: #{tpu_custom_call.1} parent=1 // pred_fallthru
      _
    // Predicated region
    $region10: #{tpu_custom_call.1} parent=1 // pred_check
      _
    $region11: #{tpu_custom_call.1} parent=1 // pred_check_branch
      %43 = sbr.rel (0) target = $region13
    $region12: #{tpu_custom_call.1} parent=1 // pred_region
      _
    $region13: #{tpu_custom_call.1} parent=1 // pred_fallthru
      _
    // Predicated region
    $region14: #{tpu_custom_call.1} parent=1 // pred_check
      _
    $region15: #{tpu_custom_call.1} parent=1 // pred_check_branch
      %45 = sbr.rel (0) target = $region17
    $region16: #{tpu_custom_call.1} parent=1 // pred_region
      %s47 = ssub.s32 2048, 2048
      %48 = vsyncadd [#allocation6], %s47
      %s49 = sshll.u32 [#allocation7], 4
      %s50 = int_to_ptr.vmem [resolvable:$true] %s49
      %55 = dma.hbm_to_vmem [thread:$0]  %s3, 2048, %s50, [#allocation6], 128, 128, 8
    $region17: #{tpu_custom_call.1} parent=1 // pred_fallthru
      _
    // Predicated region
    $region18: #{tpu_custom_call.1} parent=1 // pred_check
      _
    $region19: #{tpu_custom_call.1} parent=1 // pred_check_branch
      %57 = sbr.rel (0) target = $region21
    $region20: #{tpu_custom_call.1} parent=1 // pred_region
      _
    $region21: #{tpu_custom_call.1} parent=1 // pred_fallthru
      _
    // Predicated region
    $region22: #{tpu_custom_call.1} parent=1 // pred_check
      _
    $region23: #{tpu_custom_call.1} parent=1 // pred_check_branch
      %59 = sbr.rel (0) target = $region25
    $region24: #{tpu_custom_call.1} parent=1 // pred_region
      %s61 = ssub.s32 2048, 2048
      %62 = vsyncadd [#allocation9], %s61
      %s63 = sshll.u32 [#allocation8], 4
      %s64 = int_to_ptr.vmem [resolvable:$true] %s63
      %69 = dma.hbm_to_vmem [thread:$0]  %s5, 2048, %s64, [#allocation9], 128, 128, 8
    $region25: #{tpu_custom_call.1} parent=1 // pred_fallthru
      _
    // Predicated region
    $region26: #{tpu_custom_call.1} parent=1 // pred_check
      _
    $region27: #{tpu_custom_call.1} parent=1 // pred_check_branch
      %71 = sbr.rel (0) target = $region29
    $region28: #{tpu_custom_call.1} parent=1 // pred_region
      _
    $region29: #{tpu_custom_call.1} parent=1 // pred_fallthru
      _
    // Predicated region
    $region30: #{tpu_custom_call.1} parent=1 // pred_check
      _
    $region31: #{tpu_custom_call.1} parent=1 // pred_check_branch
      %73 = sbr.rel (0) target = $region33
    $region32: #{tpu_custom_call.1} parent=1 // pred_region
      _
    $region33: #{tpu_custom_call.1} parent=1 // pred_fallthru
      _
    // Predicated region
    $region34: #{tpu_custom_call.1} parent=1 // pred_check
      _
    $region35: #{tpu_custom_call.1} parent=1 // pred_check_branch
      %75 = sbr.rel (0) target = $region37
    $region36: #{tpu_custom_call.1} parent=1 // pred_region
      _
    $region37: #{tpu_custom_call.1} parent=1 // pred_fallthru
      _
    // Predicated region
    $region38: #{tpu_custom_call.1} parent=1 // pred_check
      _
    $region39: #{tpu_custom_call.1} parent=1 // pred_check_branch
      %77 = sbr.rel (0) target = $region41
    $region40: #{tpu_custom_call.1} parent=1 // pred_region
      %78 = dma.done [#allocation3], 256
    $region41: #{tpu_custom_call.1} parent=1 // pred_fallthru
      _
    // Predicated region
    $region42: #{tpu_custom_call.1} parent=1 // pred_check
      _
    $region43: #{tpu_custom_call.1} parent=1 // pred_check_branch
      %80 = sbr.rel (0) target = $region45
    $region44: #{tpu_custom_call.1} parent=1 // pred_region
      %81 = dma.done [#allocation6], 2048
    $region45: #{tpu_custom_call.1} parent=1 // pred_fallthru
      _
    // Predicated region
    $region46: #{tpu_custom_call.1} parent=1 // pred_check
      _
    $region47: #{tpu_custom_call.1} parent=1 // pred_check_branch
      %83 = sbr.rel (0) target = $region49
    $region48: #{tpu_custom_call.1} parent=1 // pred_region
      %84 = dma.done [#allocation6], 2048
    $region49: #{tpu_custom_call.1} parent=1 // pred_fallthru
      _
    // Predicated region
    $region50: #{tpu_custom_call.1} parent=1 // pred_check
      _
    $region51: #{tpu_custom_call.1} parent=1 // pred_check_branch
      %86 = sbr.rel (0) target = $region53
    $region52: #{tpu_custom_call.1} parent=1 // pred_region
      %87 = dma.done [#allocation9], 2048
    $region53: #{tpu_custom_call.1} parent=1 // pred_fallthru
      _
    %v88 = vld [vmem:[#allocation2] sm:$0xff]
    %v89 = vld [vmem:[#allocation2 + $0x8] sm:$0xff]
    %v90 = vld [vmem:[#allocation5] sm:$0xff]
    %v91 = vld [vmem:[#allocation5 + $0x8] sm:$0xff]
    %v92 = vld [vmem:[#allocation5 + $0x10] sm:$0xff]
    %v93 = vld [vmem:[#allocation5 + $0x18] sm:$0xff]
    %v94 = vld [vmem:[#allocation5 + $0x20] sm:$0xff]
    %v95 = vld [vmem:[#allocation5 + $0x28] sm:$0xff]
    %v96 = vld [vmem:[#allocation5 + $0x30] sm:$0xff]
    %v97 = vld [vmem:[#allocation5 + $0x38] sm:$0xff]
    %v98 = vld [vmem:[#allocation5 + $0x40] sm:$0xff]
    %v99 = vld [vmem:[#allocation5 + $0x48] sm:$0xff]
    %v100 = vld [vmem:[#allocation5 + $0x50] sm:$0xff]
    %v101 = vld [vmem:[#allocation5 + $0x58] sm:$0xff]
    %v102 = vld [vmem:[#allocation5 + $0x60] sm:$0xff]
    %v103 = vld [vmem:[#allocation5 + $0x68] sm:$0xff]
    %v104 = vld [vmem:[#allocation5 + $0x70] sm:$0xff]
    %v105 = vld [vmem:[#allocation5 + $0x78] sm:$0xff]
    %v106 = vld [vmem:[%s2] sm:$0x1]
    %v108 = vlaneseq
    %v109 = vshrl.u32 %v108, 7
    %v110 = vsub.s32 0, %v109
    %v111 = vrot.slane %v106, %v110
    %113 = vmatprep.subr.mxu0 0.0
    %114 = vmatpush1.xpose.msra.mxu0 %v90
    %115 = vmatprep.subr.mxu0 0.0
    %116 = vmatpush1.xpose.msra.mxu0 %v91
    %117 = vmatprep.subr.mxu0 0.0
    %118 = vmatpush1.xpose.msra.mxu0 %v92
    %119 = vmatprep.subr.mxu0 0.0
    %120 = vmatpush1.xpose.msra.mxu0 %v93
    %121 = vmatprep.subr.mxu0 0.0
    %122 = vmatpush1.xpose.msra.mxu0 %v94
    %123 = vmatprep.subr.mxu0 0.0
    %124 = vmatpush1.xpose.msra.mxu0 %v95
    %125 = vmatprep.subr.mxu0 0.0
    %126 = vmatpush1.xpose.msra.mxu0 %v96
    %127 = vmatprep.subr.mxu0 0.0
    %128 = vmatpush1.xpose.msra.mxu0 %v97
    %129 = vmatprep.subr.mxu0 0.0
    %130 = vmatpush1.xpose.msra.mxu0 %v98
    %131 = vmatprep.subr.mxu0 0.0
    %132 = vmatpush1.xpose.msra.mxu0 %v99
    %133 = vmatprep.subr.mxu0 0.0
    %134 = vmatpush1.xpose.msra.mxu0 %v100
    %135 = vmatprep.subr.mxu0 0.0
    %136 = vmatpush1.xpose.msra.mxu0 %v101
    %137 = vmatprep.subr.mxu0 0.0
    %138 = vmatpush1.xpose.msra.mxu0 %v102
    %139 = vmatprep.subr.mxu0 0.0
    %140 = vmatpush1.xpose.msra.mxu0 %v103
    %141 = vmatprep.subr.mxu0 0.0
    %142 = vmatpush1.xpose.msra.mxu0 %v104
    %143 = vmatprep.subr.mxu0 0.0
    %144 = vmatpush1.xpose.msra.mxu0 %v105
    %145 = vmatprep.subr.mxu0 0.0
    %146 = vmatpush1.xpose.msra.mxu0 0.0
    %147 = vmatprep.subr.mxu0 0.0
    %148 = vmatpush1.xpose.msra.mxu0 0.0
    %149 = vmatprep.subr.mxu0 0.0
    %150 = vmatpush1.xpose.msra.mxu0 0.0
    %151 = vmatprep.subr.mxu0 0.0
    %152 = vmatpush1.xpose.msra.mxu0 0.0
    %153 = vmatprep.subr.mxu0 0.0
    %154 = vmatpush1.xpose.msra.mxu0 0.0
    %155 = vmatprep.subr.mxu0 0.0
    %156 = vmatpush1.xpose.msra.mxu0 0.0
    %157 = vmatprep.subr.mxu0 0.0
    %158 = vmatpush1.xpose.msra.mxu0 0.0
    %159 = vmatprep.subr.mxu0 0.0
    %160 = vmatpush1.xpose.msra.mxu0 0.0
    %161 = vmatprep.subr.mxu0 0.0
    %162 = vmatpush1.xpose.msra.mxu0 0.0
    %163 = vmatprep.subr.mxu0 0.0
    %164 = vmatpush1.xpose.msra.mxu0 0.0
    %165 = vmatprep.subr.mxu0 0.0
    %166 = vmatpush1.xpose.msra.mxu0 0.0
    %167 = vmatprep.subr.mxu0 0.0
    %168 = vmatpush1.xpose.msra.mxu0 0.0
    %169 = vmatprep.subr.mxu0 0.0
    %170 = vmatpush1.xpose.msra.mxu0 0.0
    %171 = vmatprep.subr.mxu0 0.0
    %172 = vmatpush1.xpose.msra.mxu0 0.0
    %173 = vmatprep.subr.mxu0 0.0
    %174 = vmatpush1.xpose.msra.mxu0 0.0
    %175 = vmatprep.subr.mxu0 0.0
    %176 = vmatpush1.xpose.msra.mxu0 0.0
    %177 = vmatprep.mubr.f32.mxu0 0.0
    %178 = vmatmul.mubr.f32.gmra.mrb[0].mxu0 %v88
    %v179 = vpop.f32.mrb[0].mxu0
    %v180 = vadd.f32 %v111, %v179
    %v181 = vpop.f32.mrb[0].mxu0
    %182 = vmatprep.mubr.f32.mxu0 0.0
    %183 = vmatmul.mubr.f32.gmra.mrb[0].mxu0 %v89
    %v184 = vpop.f32.mrb[0].mxu0
    %v185 = vadd.f32 %v111, %v184
    %v186 = vpop.f32.mrb[0].mxu0
    %187 = vdwg.mxu0
    %v188 = vmax.f32 %v180, 0.0
    %v189 = vmax.f32 %v185, 0.0
    %v190 = vld [vmem:[#allocation7] sm:$0xff]
    %v191 = vld [vmem:[#allocation7 + $0x8] sm:$0xff]
    %v192 = vld [vmem:[#allocation7 + $0x10] sm:$0xff]
    %v193 = vld [vmem:[#allocation7 + $0x18] sm:$0xff]
    %v194 = vld [vmem:[#allocation7 + $0x20] sm:$0xff]
    %v195 = vld [vmem:[#allocation7 + $0x28] sm:$0xff]
    %v196 = vld [vmem:[#allocation7 + $0x30] sm:$0xff]
    %v197 = vld [vmem:[#allocation7 + $0x38] sm:$0xff]
    %v198 = vld [vmem:[#allocation7 + $0x40] sm:$0xff]
    %v199 = vld [vmem:[#allocation7 + $0x48] sm:$0xff]
    %v200 = vld [vmem:[#allocation7 + $0x50] sm:$0xff]
    %v201 = vld [vmem:[#allocation7 + $0x58] sm:$0xff]
    %v202 = vld [vmem:[#allocation7 + $0x60] sm:$0xff]
    %v203 = vld [vmem:[#allocation7 + $0x68] sm:$0xff]
    %v204 = vld [vmem:[#allocation7 + $0x70] sm:$0xff]
    %v205 = vld [vmem:[#allocation7 + $0x78] sm:$0xff]
    %v206 = vld [vmem:[%s4] sm:$0x1]
    %v208 = vlaneseq
    %v209 = vshrl.u32 %v208, 7
    %v210 = vsub.s32 0, %v209
    %v211 = vrot.slane %v206, %v210
    %213 = vmatprep.subr.mxu0 0.0
    %214 = vmatpush1.xpose.msra.mxu0 %v190
    %215 = vmatprep.subr.mxu0 0.0
    %216 = vmatpush1.xpose.msra.mxu0 %v191
    %217 = vmatprep.subr.mxu0 0.0
    %218 = vmatpush1.xpose.msra.mxu0 %v192
    %219 = vmatprep.subr.mxu0 0.0
    %220 = vmatpush1.xpose.msra.mxu0 %v193
    %221 = vmatprep.subr.mxu0 0.0
    %222 = vmatpush1.xpose.msra.mxu0 %v194
    %223 = vmatprep.subr.mxu0 0.0
    %224 = vmatpush1.xpose.msra.mxu0 %v195
    %225 = vmatprep.subr.mxu0 0.0
    %226 = vmatpush1.xpose.msra.mxu0 %v196
    %227 = vmatprep.subr.mxu0 0.0
    %228 = vmatpush1.xpose.msra.mxu0 %v197
    %229 = vmatprep.subr.mxu0 0.0
    %230 = vmatpush1.xpose.msra.mxu0 %v198
    %231 = vmatprep.subr.mxu0 0.0
    %232 = vmatpush1.xpose.msra.mxu0 %v199
    %233 = vmatprep.subr.mxu0 0.0
    %234 = vmatpush1.xpose.msra.mxu0 %v200
    %235 = vmatprep.subr.mxu0 0.0
    %236 = vmatpush1.xpose.msra.mxu0 %v201
    %237 = vmatprep.subr.mxu0 0.0
    %238 = vmatpush1.xpose.msra.mxu0 %v202
    %239 = vmatprep.subr.mxu0 0.0
    %240 = vmatpush1.xpose.msra.mxu0 %v203
    %241 = vmatprep.subr.mxu0 0.0
    %242 = vmatpush1.xpose.msra.mxu0 %v204
    %243 = vmatprep.subr.mxu0 0.0
    %244 = vmatpush1.xpose.msra.mxu0 %v205
    %245 = vmatprep.subr.mxu0 0.0
    %246 = vmatpush1.xpose.msra.mxu0 0.0
    %247 = vmatprep.subr.mxu0 0.0
    %248 = vmatpush1.xpose.msra.mxu0 0.0
    %249 = vmatprep.subr.mxu0 0.0
    %250 = vmatpush1.xpose.msra.mxu0 0.0
    %251 = vmatprep.subr.mxu0 0.0
    %252 = vmatpush1.xpose.msra.mxu0 0.0
    %253 = vmatprep.subr.mxu0 0.0
    %254 = vmatpush1.xpose.msra.mxu0 0.0
    %255 = vmatprep.subr.mxu0 0.0
    %256 = vmatpush1.xpose.msra.mxu0 0.0
    %257 = vmatprep.subr.mxu0 0.0
    %258 = vmatpush1.xpose.msra.mxu0 0.0
    %259 = vmatprep.subr.mxu0 0.0
    %260 = vmatpush1.xpose.msra.mxu0 0.0
    %261 = vmatprep.subr.mxu0 0.0
    %262 = vmatpush1.xpose.msra.mxu0 0.0
    %263 = vmatprep.subr.mxu0 0.0
    %264 = vmatpush1.xpose.msra.mxu0 0.0
    %265 = vmatprep.subr.mxu0 0.0
    %266 = vmatpush1.xpose.msra.mxu0 0.0
    %267 = vmatprep.subr.mxu0 0.0
    %268 = vmatpush1.xpose.msra.mxu0 0.0
    %269 = vmatprep.subr.mxu0 0.0
    %270 = vmatpush1.xpose.msra.mxu0 0.0
    %271 = vmatprep.subr.mxu0 0.0
    %272 = vmatpush1.xpose.msra.mxu0 0.0
    %273 = vmatprep.subr.mxu0 0.0
    %274 = vmatpush1.xpose.msra.mxu0 0.0
    %275 = vmatprep.subr.mxu0 0.0
    %276 = vmatpush1.xpose.msra.mxu0 0.0
    %277 = vmatprep.mubr.f32.mxu0 0.0
    %278 = vmatmul.mubr.f32.gmra.mrb[0].mxu0 %v188
    %v279 = vpop.f32.mrb[0].mxu0
    %v280 = vadd.f32 %v211, %v279
    %v281 = vpop.f32.mrb[0].mxu0
    %282 = vmatprep.mubr.f32.mxu0 0.0
    %283 = vmatmul.mubr.f32.gmra.mrb[0].mxu0 %v189
    %v284 = vpop.f32.mrb[0].mxu0
    %v285 = vadd.f32 %v211, %v284
    %v286 = vpop.f32.mrb[0].mxu0
    %287 = vdwg.mxu0
    %v288 = vmax.f32 %v280, 0.0
    %v289 = vmax.f32 %v285, 0.0
    %v290 = vld [vmem:[#allocation8] sm:$0xff]
    %v291 = vld [vmem:[#allocation8 + $0x8] sm:$0xff]
    %v292 = vld [vmem:[#allocation8 + $0x10] sm:$0xff]
    %v293 = vld [vmem:[#allocation8 + $0x18] sm:$0xff]
    %v294 = vld [vmem:[#allocation8 + $0x20] sm:$0xff]
    %v295 = vld [vmem:[#allocation8 + $0x28] sm:$0xff]
    %v296 = vld [vmem:[#allocation8 + $0x30] sm:$0xff]
    %v297 = vld [vmem:[#allocation8 + $0x38] sm:$0xff]
    %v298 = vld [vmem:[#allocation8 + $0x40] sm:$0xff]
    %v299 = vld [vmem:[#allocation8 + $0x48] sm:$0xff]
    %v300 = vld [vmem:[#allocation8 + $0x50] sm:$0xff]
    %v301 = vld [vmem:[#allocation8 + $0x58] sm:$0xff]
    %v302 = vld [vmem:[#allocation8 + $0x60] sm:$0xff]
    %v303 = vld [vmem:[#allocation8 + $0x68] sm:$0xff]
    %v304 = vld [vmem:[#allocation8 + $0x70] sm:$0xff]
    %v305 = vld [vmem:[#allocation8 + $0x78] sm:$0xff]
    %v306 = vld [vmem:[%s6] sm:$0x1]
    %v308 = vlaneseq
    %v309 = vshrl.u32 %v308, 7
    %v310 = vsub.s32 0, %v309
    %v311 = vrot.slane %v306, %v310
    %313 = vmatprep.subr.mxu0 0.0
    %314 = vmatpush1.xpose.msra.mxu0 %v290
    %315 = vmatprep.subr.mxu0 0.0
    %316 = vmatpush1.xpose.msra.mxu0 %v291
    %317 = vmatprep.subr.mxu0 0.0
    %318 = vmatpush1.xpose.msra.mxu0 %v292
    %319 = vmatprep.subr.mxu0 0.0
    %320 = vmatpush1.xpose.msra.mxu0 %v293
    %321 = vmatprep.subr.mxu0 0.0
    %322 = vmatpush1.xpose.msra.mxu0 %v294
    %323 = vmatprep.subr.mxu0 0.0
    %324 = vmatpush1.xpose.msra.mxu0 %v295
    %325 = vmatprep.subr.mxu0 0.0
    %326 = vmatpush1.xpose.msra.mxu0 %v296
    %327 = vmatprep.subr.mxu0 0.0
    %328 = vmatpush1.xpose.msra.mxu0 %v297
    %329 = vmatprep.subr.mxu0 0.0
    %330 = vmatpush1.xpose.msra.mxu0 %v298
    %331 = vmatprep.subr.mxu0 0.0
    %332 = vmatpush1.xpose.msra.mxu0 %v299
    %333 = vmatprep.subr.mxu0 0.0
    %334 = vmatpush1.xpose.msra.mxu0 %v300
    %335 = vmatprep.subr.mxu0 0.0
    %336 = vmatpush1.xpose.msra.mxu0 %v301
    %337 = vmatprep.subr.mxu0 0.0
    %338 = vmatpush1.xpose.msra.mxu0 %v302
    %339 = vmatprep.subr.mxu0 0.0
    %340 = vmatpush1.xpose.msra.mxu0 %v303
    %341 = vmatprep.subr.mxu0 0.0
    %342 = vmatpush1.xpose.msra.mxu0 %v304
    %343 = vmatprep.subr.mxu0 0.0
    %344 = vmatpush1.xpose.msra.mxu0 %v305
    %345 = vmatprep.subr.mxu0 0.0
    %346 = vmatpush1.xpose.msra.mxu0 0.0
    %347 = vmatprep.subr.mxu0 0.0
    %348 = vmatpush1.xpose.msra.mxu0 0.0
    %349 = vmatprep.subr.mxu0 0.0
    %350 = vmatpush1.xpose.msra.mxu0 0.0
    %351 = vmatprep.subr.mxu0 0.0
    %352 = vmatpush1.xpose.msra.mxu0 0.0
    %353 = vmatprep.subr.mxu0 0.0
    %354 = vmatpush1.xpose.msra.mxu0 0.0
    %355 = vmatprep.subr.mxu0 0.0
    %356 = vmatpush1.xpose.msra.mxu0 0.0
    %357 = vmatprep.subr.mxu0 0.0
    %358 = vmatpush1.xpose.msra.mxu0 0.0
    %359 = vmatprep.subr.mxu0 0.0
    %360 = vmatpush1.xpose.msra.mxu0 0.0
    %361 = vmatprep.subr.mxu0 0.0
    %362 = vmatpush1.xpose.msra.mxu0 0.0
    %363 = vmatprep.subr.mxu0 0.0
    %364 = vmatpush1.xpose.msra.mxu0 0.0
    %365 = vmatprep.subr.mxu0 0.0
    %366 = vmatpush1.xpose.msra.mxu0 0.0
    %367 = vmatprep.subr.mxu0 0.0
    %368 = vmatpush1.xpose.msra.mxu0 0.0
    %369 = vmatprep.subr.mxu0 0.0
    %370 = vmatpush1.xpose.msra.mxu0 0.0
    %371 = vmatprep.subr.mxu0 0.0
    %372 = vmatpush1.xpose.msra.mxu0 0.0
    %373 = vmatprep.subr.mxu0 0.0
    %374 = vmatpush1.xpose.msra.mxu0 0.0
    %375 = vmatprep.subr.mxu0 0.0
    %376 = vmatpush1.xpose.msra.mxu0 0.0
    %377 = vmatprep.mubr.f32.mxu0 0.0
    %378 = vmatmul.mubr.f32.gmra.mrb[0].mxu0 %v288
    %v379 = vpop.f32.mrb[0].mxu0
    %v380 = vadd.f32 %v311, %v379
    %v381 = vpop.f32.mrb[0].mxu0
    %382 = vmatprep.mubr.f32.mxu0 0.0
    %383 = vmatmul.mubr.f32.gmra.mrb[0].mxu0 %v289
    %v384 = vpop.f32.mrb[0].mxu0
    %v385 = vadd.f32 %v311, %v384
    %v386 = vpop.f32.mrb[0].mxu0
    %387 = vdwg.mxu0
    %v388 = vmax.f32 %v380, 0.0
    %v389 = vmax.f32 %v385, 0.0
    %390 = vadd.xlane.f32.xlu0 %v388
    %v391 = vpop.xlane.xlu0 %390
    %392 = vadd.xlane.f32.xlu0 %v389
    %v393 = vpop.xlane.xlu0 %392
    %v394 = vmul.f32 %v391, 0.03125
    %v395 = vmul.f32 %v393, 0.03125
    %v396 = vlaneseq
    %v397 = vand.u32 %v396, 127
    %vm398 = vcmp.lt.s32.totalorder %v397, 32
    %v399 = vsub.f32 %v388, %v394
    %v400 = vsub.f32 %v389, %v395
    %v401 = vsel %vm398, %v399, 0.0
    %v402 = vsel %vm398, %v400, 0.0
    %v403 = vmul.f32 %v401, %v401
    %v404 = vmul.f32 %v402, %v402
    %405 = vadd.xlane.f32.xlu0 %v403
    %v406 = vpop.xlane.xlu0 %405
    %407 = vadd.xlane.f32.xlu0 %v404
    %v408 = vpop.xlane.xlu0 %407
    %v409 = vmul.f32 %v406, 0.03125
    %v410 = vmul.f32 %v408, 0.03125
    %v411 = vadd.f32 %v409, 1e-05
    %v412 = vadd.f32 %v410, 1e-05
    %v413 = vrsqrt.pop %v411
    %v414 = vrsqrt.pop %v412
    %v415 = vmul.f32 %v401, %v413
    %v416 = vmul.f32 %v402, %v414
    %v417 = vld [vmem:[%s7] sm:$0x1]
    %v419 = vlaneseq
    %v420 = vshrl.u32 %v419, 7
    %v421 = vsub.s32 0, %v420
    %v422 = vrot.slane %v417, %v421
    %v424 = vmul.f32 %v415, %v422
    %v425 = vmul.f32 %v416, %v422
    %v426 = vld [vmem:[%s8] sm:$0x1]
    %v428 = vlaneseq
    %v429 = vshrl.u32 %v428, 7
    %v430 = vsub.s32 0, %v429
    %v431 = vrot.slane %v426, %v430
    %v433 = vadd.f32 %v424, %v431
    %v434 = vadd.f32 %v425, %v431
    %435 = vst [vmem:[#allocation10] sm:$0xff] %v433
    %436 = vst [vmem:[#allocation10 + $0x8] sm:$0xff] %v434
    // Predicated region
    $region54: #{tpu_custom_call.1} parent=1 // pred_check
      _
    $region55: #{tpu_custom_call.1} parent=1 // pred_check_branch
      %438 = sbr.rel (0) target = $region57
    $region56: #{tpu_custom_call.1} parent=1 // pred_region
      %s440 = ssub.s32 256, 256
      %441 = vsyncadd [#allocation4], %s440
      %s442 = sshll.u32 [#allocation10], 4
      %s443 = int_to_ptr.vmem [resolvable:$true] %s442
      %448 = dma.vmem_to_hbm [thread:$0]  %s443, 256, %s9, [#allocation4], 128, 128, 8
    $region57: #{tpu_custom_call.1} parent=1 // pred_fallthru
      _
    // Predicated region
    $region58: #{tpu_custom_call.1} parent=1 // pred_check
      _
    $region59: #{tpu_custom_call.1} parent=1 // pred_check_branch
      %450 = sbr.rel (0) target = $region61
    $region60: #{tpu_custom_call.1} parent=1 // pred_region
      %451 = dma.done [#allocation4], 256
    $region61: #{tpu_custom_call.1} parent=1 // pred_fallthru
      _
    %452 = vsyncpa [#allocation3], 1
    %453 = vsyncpa [#allocation6], 1
    %454 = vsyncpa [#allocation9], 1
    %455 = vsyncpa [#allocation4], 1

</llo_original>
